<compile_context>
chip_gen: v7x
topology: tpu7x:2x2x1
jax: 0.10.0
libtpu: 0.0.40
codegen_flags: <defaults>
</compile_context>

<pallas_src>
import jax
import jax.numpy as jnp
from jax.experimental import pallas as pl
from jax.experimental.pallas import tpu as pltpu


_VMEM_LIMIT = 32 * 1024 * 1024          # explicit: raises v5e's 16 MiB default
_TARGET_BLOCK_BYTES = 2 * 1024 * 1024   # ~2 MiB blocks sit near the HBM roofline
_FUSED_MAX_SLAB_BYTES = 6 * 1024 * 1024 # 4x (in+out, double-buffered) <= 24 MiB


def _fused_afs_kernel(x_ref, w1t_ref, b1_ref, w2t_ref, b2_ref, o_ref):
    """Single pass: global-avg-pool + 2x conv1x1 + sigmoid + broadcast scale."""
    xf = x_ref[...].astype(jnp.float32)                     # (Bn, C, HW)
    pooled = jnp.mean(xf, axis=-1)                          # (Bn, C)   XLU reduce
    y = jnp.dot(pooled, w1t_ref[...],
                preferred_element_type=jnp.float32) + b1_ref[...]
    y = jnp.dot(y, w2t_ref[...],
                preferred_element_type=jnp.float32) + b2_ref[...]
    gate = jax.nn.sigmoid(y)                                # (Bn, C)   EUP
    o_ref[...] = (gate[:, :, None] * xf).astype(o_ref.dtype)


def _scale_kernel(g_ref, x_ref, o_ref):
    # g_ref: (1, C, 1) per-channel gate; x_ref: (1, C, T) lane-dense tile.
    o_ref[0] = (g_ref[0] * x_ref[0]).astype(o_ref.dtype)


def afs_forward(x_nchw, w1, b1, w2, b2, *, hw_tile=8192):
    """x_nchw: (N, 128, H, W).  w*: (128,128,1,1), b*: (128,)."""
    N, C, H, W = x_nchw.shape
    HW = H * W

    # Free reshape: C, H, W contiguous -> (N, C, HW), HW on the lane axis.
    x = x_nchw.reshape(N, C, HW)
    itemsize = jnp.dtype(x.dtype).itemsize
    slab_bytes = C * HW * itemsize

    # Weights as (in, out) so gate = sigmoid((pooled @ W1t + b1) @ W2t + b2).
    w1t = jnp.transpose(w1.reshape(C, C).astype(jnp.float32))
    w2t = jnp.transpose(w2.reshape(C, C).astype(jnp.float32))
    b1r = b1.reshape(1, C).astype(jnp.float32)
    b2r = b2.reshape(1, C).astype(jnp.float32)

    if slab_bytes <= _FUSED_MAX_SLAB_BYTES:
        # ---------- fused single-pass kernel: 1R + 1W of x ----------
        # Pack batch elements toward ~2 MiB blocks, but keep >= 2 grid steps
        # when N >= 2 so both v7x TensorCores are used.
        bn = max(1, _TARGET_BLOCK_BYTES // slab_bytes)
        if N >= 2:
            bn = min(bn, max(1, N // 2))
        bn = min(bn, N)
        grid = (pl.cdiv(N, bn),)

        out = pl.pallas_call(
            _fused_afs_kernel,
            out_shape=jax.ShapeDtypeStruct((N, C, HW), x.dtype),
            grid_spec=pltpu.PrefetchScalarGridSpec(
                num_scalar_prefetch=0,
                grid=grid,
                in_specs=[
                    pl.BlockSpec((bn, C, HW), lambda n: (n, 0, 0)),
                    pl.BlockSpec((C, C), lambda n: (0, 0)),   # resident weights
                    pl.BlockSpec((1, C), lambda n: (0, 0)),
                    pl.BlockSpec((C, C), lambda n: (0, 0)),
                    pl.BlockSpec((1, C), lambda n: (0, 0)),
                ],
                out_specs=pl.BlockSpec((bn, C, HW), lambda n: (n, 0, 0)),
            ),
            compiler_params=pltpu.CompilerParams(
                dimension_semantics=("parallel",),
                vmem_limit_bytes=_VMEM_LIMIT),
        )(x, w1t, b1r, w2t, b2r)
        return out.reshape(N, C, H, W)

    # ---------- fallback for very large HW: two-pass (2R + 1W of x) ----------
    # Gate in plain jnp: far below MXU launch cost, XLA fuses it with the mean.
    pooled = jnp.mean(x.astype(jnp.float32), axis=-1)        # (N, C): one read of x
    y = pooled @ w1t + b1r
    y = y @ w2t + b2r
    gate = jax.nn.sigmoid(y).astype(x.dtype).reshape(N, C, 1)

    T = HW if HW <= hw_tile else hw_tile                      # lane-dense tiles
    grid = (N, pl.cdiv(HW, T))
    out = pl.pallas_call(
        _scale_kernel,
        out_shape=jax.ShapeDtypeStruct((N, C, HW), x.dtype),
        grid_spec=pltpu.PrefetchScalarGridSpec(
            num_scalar_prefetch=0,
            grid=grid,
            in_specs=[
                pl.BlockSpec((1, C, 1), lambda n, t: (n, 0, 0)),
                pl.BlockSpec((1, C, T), lambda n, t: (n, 0, t)),
            ],
            out_specs=pl.BlockSpec((1, C, T), lambda n, t: (n, 0, t)),
        ),
        compiler_params=pltpu.CompilerParams(
            dimension_semantics=("parallel", "parallel"),
            vmem_limit_bytes=_VMEM_LIMIT),
    )(gate, x)
    return out.reshape(N, C, H, W)


def afs_reference(x_nchw, w1, b1, w2, b2):
    """Pure-JAX reference matching the PyTorch forward."""
    N, C, H, W = x_nchw.shape
    y = jnp.mean(x_nchw, axis=(2, 3))                         # (N, C)
    y = y @ w1.reshape(C, C).T + b1
    y = y @ w2.reshape(C, C).T + b2
    y = jax.nn.sigmoid(y)
    return y[:, :, None, None] * x_nchw


if __name__ == "__main__":
    key = jax.random.PRNGKey(0)
    kx, kw1, kb1, kw2, kb2 = jax.random.split(key, 5)

    N, C, H, W = 2, 128, 16, 16          # in_channels fixed at 128 by the module
    x = jax.random.normal(kx, (N, C, H, W), dtype=jnp.float32)

    # Deterministic parameter init (uniform, same shapes as nn.Conv2d 1x1).
    bound = 1.0 / (C ** 0.5)
    w1 = jax.random.uniform(kw1, (C, C, 1, 1), jnp.float32, -bound, bound)
    b1 = jax.random.uniform(kb1, (C,), jnp.float32, -bound, bound)
    w2 = jax.random.uniform(kw2, (C, C, 1, 1), jnp.float32, -bound, bound)
    b2 = jax.random.uniform(kb2, (C,), jnp.float32, -bound, bound)

    afs = jax.jit(afs_forward)
    out = jax.block_until_ready(afs(x, w1, b1, w2, b2))

    ref = jax.block_until_ready(afs_reference(x, w1, b1, w2, b2))
    assert out.shape == (N, C, H, W)
    assert jnp.allclose(out, ref, atol=1e-5, rtol=1e-5)

    print("KERNEL_OK")
</pallas_src>

<mosaic_0001>
module attributes {stable_mosaic.version = 11 : i64} {
  func.func @_fused_afs_kernel(%arg0: i32, %arg1: memref<1x128x256xf32, #tpu.memory_space<vmem>>, %arg2: memref<128x128xf32, #tpu.memory_space<vmem>>, %arg3: memref<1x128xf32, #tpu.memory_space<vmem>>, %arg4: memref<128x128xf32, #tpu.memory_space<vmem>>, %arg5: memref<1x128xf32, #tpu.memory_space<vmem>>, %arg6: memref<1x128x256xf32, #tpu.memory_space<vmem>>) attributes {dimension_semantics = [#tpu.dimension_semantics<parallel>], iteration_bounds = array<i64: 2>, scalar_prefetch = 0 : i64, scratch_operands = 0 : i64, tpu.core_type = #tpu.core_type<tc>, window_params = [{transform_indices = @transform_0, window_bounds = array<i64: 1, 128, 256>}, {pipeline_mode = #tpu.pipeline_mode<synchronous>, transform_indices = @transform_1, window_bounds = array<i64: 128, 128>}, {pipeline_mode = #tpu.pipeline_mode<synchronous>, transform_indices = @transform_2, window_bounds = array<i64: 1, 128>}, {pipeline_mode = #tpu.pipeline_mode<synchronous>, transform_indices = @transform_3, window_bounds = array<i64: 128, 128>}, {pipeline_mode = #tpu.pipeline_mode<synchronous>, transform_indices = @transform_4, window_bounds = array<i64: 1, 128>}, {transform_indices = @transform_5, window_bounds = array<i64: 1, 128, 256>}]} {
    %c0 = arith.constant 0 : index
    %c0_0 = arith.constant 0 : index
    %c0_1 = arith.constant 0 : index
    %0 = vector.load %arg1[%c0, %c0_0, %c0_1] : memref<1x128x256xf32, #tpu.memory_space<vmem>>, vector<1x128x256xf32>
    %cst = arith.constant dense<0.000000e+00> : vector<1x128xf32>
    %1 = vector.multi_reduction <add>, %0, %cst [2] : vector<1x128x256xf32> to vector<1x128xf32>
    %cst_2 = arith.constant 2.560000e+02 : f32
    %2 = vector.broadcast %cst_2 : f32 to vector<1x128xf32>
    %3 = arith.divf %1, %2 : vector<1x128xf32>
    %c0_3 = arith.constant 0 : index
    %c0_4 = arith.constant 0 : index
    %4 = vector.load %arg2[%c0_3, %c0_4] : memref<128x128xf32, #tpu.memory_space<vmem>>, vector<128x128xf32>
    %cst_5 = arith.constant dense<0.000000e+00> : vector<1x128xf32>
    %5 = tpu.matmul %3, %4, %cst_5 {dimension_numbers = #tpu.dot_dimension_numbers<[1], [0], [0], [1], [0, 0, 1, 1], [], []>} : vector<1x128xf32>, vector<128x128xf32>, vector<1x128xf32> -> vector<1x128xf32>
    %c0_6 = arith.constant 0 : index
    %c0_7 = arith.constant 0 : index
    %6 = vector.load %arg3[%c0_6, %c0_7] : memref<1x128xf32, #tpu.memory_space<vmem>>, vector<1x128xf32>
    %7 = arith.addf %5, %6 : vector<1x128xf32>
    %c0_8 = arith.constant 0 : index
    %c0_9 = arith.constant 0 : index
    %8 = vector.load %arg4[%c0_8, %c0_9] : memref<128x128xf32, #tpu.memory_space<vmem>>, vector<128x128xf32>
    %cst_10 = arith.constant dense<0.000000e+00> : vector<1x128xf32>
    %9 = tpu.matmul %7, %8, %cst_10 {dimension_numbers = #tpu.dot_dimension_numbers<[1], [0], [0], [1], [0, 0, 1, 1], [], []>} : vector<1x128xf32>, vector<128x128xf32>, vector<1x128xf32> -> vector<1x128xf32>
    %c0_11 = arith.constant 0 : index
    %c0_12 = arith.constant 0 : index
    %10 = vector.load %arg5[%c0_11, %c0_12] : memref<1x128xf32, #tpu.memory_space<vmem>>, vector<1x128xf32>
    %11 = arith.addf %9, %10 : vector<1x128xf32>
    %12 = arith.negf %11 : vector<1x128xf32>
    %13 = math.exp %12 : vector<1x128xf32>
    %cst_13 = arith.constant 1.000000e+00 : f32
    %14 = vector.broadcast %cst_13 : f32 to vector<1x128xf32>
    %15 = arith.addf %14, %13 : vector<1x128xf32>
    %16 = arith.divf %14, %15 : vector<1x128xf32>
    %17 = vector.shape_cast %16 : vector<1x128xf32> to vector<1x128x1xf32>
    %18 = vector.broadcast %17 : vector<1x128x1xf32> to vector<1x128x256xf32>
    %19 = arith.mulf %18, %0 : vector<1x128x256xf32>
    %c0_14 = arith.constant 0 : index
    %c0_15 = arith.constant 0 : index
    %c0_16 = arith.constant 0 : index
    %20 = vector.load %arg6[%c0_14, %c0_15, %c0_16] : memref<1x128x256xf32, #tpu.memory_space<vmem>>, vector<1x128x256xf32>
    tpu.vector_store %arg6[%c0_14, %c0_15, %c0_16], %19 {strides = array<i32>} : memref<1x128x256xf32, #tpu.memory_space<vmem>>, vector<1x128x256xf32>,
    return
  }
  func.func @transform_0(%arg0: i32) -> (i32, i32, i32) {
    %c0_i32 = arith.constant 0 : i32
    %c0_i32_0 = arith.constant 0 : i32
    %c0_i32_1 = arith.constant 0 : i32
    return %arg0, %c0_i32, %c0_i32_0 : i32, i32, i32
  }
  func.func @transform_1(%arg0: i32) -> (i32, i32) {
    %c0_i32 = arith.constant 0 : i32
    %c0_i32_0 = arith.constant 0 : i32
    %c0_i32_1 = arith.constant 0 : i32
    return %c0_i32, %c0_i32_0 : i32, i32
  }
  func.func @transform_2(%arg0: i32) -> (i32, i32) {
    %c0_i32 = arith.constant 0 : i32
    %c0_i32_0 = arith.constant 0 : i32
    %c0_i32_1 = arith.constant 0 : i32
    return %c0_i32, %c0_i32_0 : i32, i32
  }
  func.func @transform_3(%arg0: i32) -> (i32, i32) {
    %c0_i32 = arith.constant 0 : i32
    %c0_i32_0 = arith.constant 0 : i32
    %c0_i32_1 = arith.constant 0 : i32
    return %c0_i32, %c0_i32_0 : i32, i32
  }
  func.func @transform_4(%arg0: i32) -> (i32, i32) {
    %c0_i32 = arith.constant 0 : i32
    %c0_i32_0 = arith.constant 0 : i32
    %c0_i32_1 = arith.constant 0 : i32
    return %c0_i32, %c0_i32_0 : i32, i32
  }
  func.func @transform_5(%arg0: i32) -> (i32, i32, i32) {
    %c0_i32 = arith.constant 0 : i32
    %c0_i32_0 = arith.constant 0 : i32
    %c0_i32_1 = arith.constant 0 : i32
    return %arg0, %c0_i32, %c0_i32_0 : i32, i32, i32
  }
}

</mosaic_0001>

<llo_original>
// kernel: afs_forward.1
$region0: #{afs_forward.1}
  #allocation0 [shape = 'u32[]', space=smem, size = 0x4, offset = 0x4, fixed_abs, tag = 'smem constant byte address 0x4 - core index']
  #allocation1 [shape = 'u32[144,128]{1,0:T(1,128)}', space=vmem, size = 0x12000, scoped, tag = 'internal scratch']
  %s0 = inlined_call_operand.vmem [shape: f32[2,128,256], index: 0, kind: input, shape index: {}]
  %s1 = inlined_call_operand.vmem [shape: f32[128,128], index: 1, kind: input, shape index: {}]
  %s2 = inlined_call_operand.vmem [shape: f32[1,128], index: 2, kind: input, shape index: {}]
  %s3 = inlined_call_operand.vmem [shape: f32[128,128], index: 3, kind: input, shape index: {}]
  %s4 = inlined_call_operand.vmem [shape: f32[1,128], index: 4, kind: input, shape index: {}]
  %s5 = inlined_call_operand.vmem [shape: f32[2,128,256], index: 5, kind: output, shape index: {}]
  %s6 = sld [smem:[#allocation0]]
  $region53: #{afs_forward.1} parent=0
    _
  %s8 = ssub.s32 1, %s6
  %s9 = scalar_select 0, %s8, %s6
  loop: start=0, step=1, limit=4
  $region2: #{afs_forward.1} parent=0 // loop_pre_header
    _
  $region3: #{afs_forward.1} parent=0 // loop_header
    %s11 = sphi 0, %s15
    %p12 = scmp.ge.s32.totalorder %s11, 4
    %s21 = sphi 0, %s23
    %s24 = sphi 0, %s21
    %s25 = sphi 0, %s24
    %s41 = sphi 0, %s25
    %s45 = sphi 0, %s45
    %s47 = sphi 0, %s45
    %s48 = sphi 0, %s47
    %s62 = sphi 0, %s48
    %s66 = sphi 0, %s66
    %s68 = sphi 0, %s66
    %s69 = sphi 0, %s68
    %s83 = sphi 0, %s69
    %s87 = sphi 0, %s87
    %s89 = sphi 0, %s87
    %s90 = sphi 0, %s89
    %s104 = sphi 0, %s90
    %s108 = sphi 0, %s108
    %s110 = sphi 0, %s108
    %s111 = sphi 0, %s110
    %s125 = sphi 0, %s111
    %s131 = sphi 0, %s133
    %s134 = sphi 0, %s131
    %s135 = sphi 0, %s134
    %s151 = sphi 0, %s135
  $region4: #{afs_forward.1} parent=0 // loop_header_branch
    %14 = sbr.rel (%p12) target = $region8
  $region5: #{afs_forward.1} parent=0 // loop_body
    %s16 = ssub.s32 %s11, 1
    %s17 = ssub.s32 %s11, 2
    %s18 = sadd.s32 %s11, 1
    %s19 = ssub.s32 %s11, %s18
    %p20 = scmp.eq.s32.totalorder %s19, 0
    %s22 = sadd.s32 %s21, 1
    %s23 = scalar_select %p20, %s21, %s22
    %p26 = pneg %p20
    %p27 = scmp.eq.s32.totalorder %s11, 1
    %p28 = por %p26, %p27
    %p29 = scmp.ne.s32.totalorder %s21, %s24
    %p30 = scmp.eq.s32.totalorder %s11, 0
    %p31 = por %p29, %p30
    %p32 = scmp.ne.s32.totalorder %s21, %s24
    %p33 = scmp.eq.s32.totalorder %s16, 1
    %p34 = por %p32, %p33
    %p35 = scmp.ne.s32.totalorder %s24, %s25
    %p36 = scmp.eq.s32.totalorder %s16, 0
    %p37 = por %p35, %p36
    %p38 = scmp.ne.s32.totalorder %s24, %s25
    %p39 = scmp.eq.s32.totalorder %s17, 1
    %p40 = por %p38, %p39
    %p42 = scmp.ne.s32.totalorder %s25, %s41
    %p43 = scmp.eq.s32.totalorder %s17, 0
    %p44 = por %p42, %p43
    %s46 = sadd.s32 %s45, 1
    %p49 = scmp.eq.s32.totalorder %s11, 1
    %p50 = scmp.ne.s32.totalorder %s45, %s47
    %p51 = scmp.eq.s32.totalorder %s11, 0
    %p52 = por %p50, %p51
    %p53 = scmp.ne.s32.totalorder %s45, %s47
    %p54 = scmp.eq.s32.totalorder %s16, 1
    %p55 = por %p53, %p54
    %p56 = scmp.ne.s32.totalorder %s47, %s48
    %p57 = scmp.eq.s32.totalorder %s16, 0
    %p58 = por %p56, %p57
    %p59 = scmp.ne.s32.totalorder %s47, %s48
    %p60 = scmp.eq.s32.totalorder %s17, 1
    %p61 = por %p59, %p60
    %p63 = scmp.ne.s32.totalorder %s48, %s62
    %p64 = scmp.eq.s32.totalorder %s17, 0
    %p65 = por %p63, %p64
    %s67 = sadd.s32 %s66, 1
    %p70 = scmp.eq.s32.totalorder %s11, 1
    %p71 = scmp.ne.s32.totalorder %s66, %s68
    %p72 = scmp.eq.s32.totalorder %s11, 0
    %p73 = por %p71, %p72
    %p74 = scmp.ne.s32.totalorder %s66, %s68
    %p75 = scmp.eq.s32.totalorder %s16, 1
    %p76 = por %p74, %p75
    %p77 = scmp.ne.s32.totalorder %s68, %s69
    %p78 = scmp.eq.s32.totalorder %s16, 0
    %p79 = por %p77, %p78
    %p80 = scmp.ne.s32.totalorder %s68, %s69
    %p81 = scmp.eq.s32.totalorder %s17, 1
    %p82 = por %p80, %p81
    %p84 = scmp.ne.s32.totalorder %s69, %s83
    %p85 = scmp.eq.s32.totalorder %s17, 0
    %p86 = por %p84, %p85
    %s88 = sadd.s32 %s87, 1
    %p91 = scmp.eq.s32.totalorder %s11, 1
    %p92 = scmp.ne.s32.totalorder %s87, %s89
    %p93 = scmp.eq.s32.totalorder %s11, 0
    %p94 = por %p92, %p93
    %p95 = scmp.ne.s32.totalorder %s87, %s89
    %p96 = scmp.eq.s32.totalorder %s16, 1
    %p97 = por %p95, %p96
    %p98 = scmp.ne.s32.totalorder %s89, %s90
    %p99 = scmp.eq.s32.totalorder %s16, 0
    %p100 = por %p98, %p99
    %p101 = scmp.ne.s32.totalorder %s89, %s90
    %p102 = scmp.eq.s32.totalorder %s17, 1
    %p103 = por %p101, %p102
    %p105 = scmp.ne.s32.totalorder %s90, %s104
    %p106 = scmp.eq.s32.totalorder %s17, 0
    %p107 = por %p105, %p106
    %s109 = sadd.s32 %s108, 1
    %p112 = scmp.eq.s32.totalorder %s11, 1
    %p113 = scmp.ne.s32.totalorder %s108, %s110
    %p114 = scmp.eq.s32.totalorder %s11, 0
    %p115 = por %p113, %p114
    %p116 = scmp.ne.s32.totalorder %s108, %s110
    %p117 = scmp.eq.s32.totalorder %s16, 1
    %p118 = por %p116, %p117
    %p119 = scmp.ne.s32.totalorder %s110, %s111
    %p120 = scmp.eq.s32.totalorder %s16, 0
    %p121 = por %p119, %p120
    %p122 = scmp.ne.s32.totalorder %s110, %s111
    %p123 = scmp.eq.s32.totalorder %s17, 1
    %p124 = por %p122, %p123
    %p126 = scmp.ne.s32.totalorder %s111, %s125
    %p127 = scmp.eq.s32.totalorder %s17, 0
    %p128 = por %p126, %p127
    %s129 = ssub.s32 %s11, %s18
    %p130 = scmp.eq.s32.totalorder %s129, 0
    %s132 = sadd.s32 %s131, 1
    %s133 = scalar_select %p130, %s131, %s132
    %p136 = pneg %p130
    %p137 = scmp.eq.s32.totalorder %s11, 1
    %p138 = por %p136, %p137
    %p139 = scmp.ne.s32.totalorder %s131, %s134
    %p140 = scmp.eq.s32.totalorder %s11, 0
    %p141 = por %p139, %p140
    %p142 = scmp.ne.s32.totalorder %s131, %s134
    %p143 = scmp.eq.s32.totalorder %s16, 1
    %p144 = por %p142, %p143
    %p145 = scmp.ne.s32.totalorder %s134, %s135
    %p146 = scmp.eq.s32.totalorder %s16, 0
    %p147 = por %p145, %p146
    %p148 = scmp.ne.s32.totalorder %s134, %s135
    %p149 = scmp.eq.s32.totalorder %s17, 1
    %p150 = por %p148, %p149
    %p152 = scmp.ne.s32.totalorder %s135, %s151
    %p153 = scmp.eq.s32.totalorder %s17, 0
    %p154 = por %p152, %p153
    %p155 = scmp.le.s32.totalorder 1, %s11
    %p156 = scmp.lt.s32.totalorder %s11, 3
    %p157 = pnand %p155, %p156
    %p158 = pneg %p157
    // Predicated region
    $region9: #{afs_forward.1} parent=5 // pred_check
      _
    $region10: #{afs_forward.1} parent=5 // pred_check_branch
      %160 = sbr.rel (%p157) target = $region12
    $region11: #{afs_forward.1} parent=5 // pred_region
      %s161 = ssub.s32 %s11, 1
      // Predicated region
      $region13: #{afs_forward.1} parent=11 // pred_check
        %p162 = pneg %p58
      $region14: #{afs_forward.1} parent=11 // pred_check_branch
        %164 = sbr.rel (%p162) target = $region16
      $region15: #{afs_forward.1} parent=11 // pred_region
        _
      $region16: #{afs_forward.1} parent=11 // pred_fallthru
        _
      // Predicated region
      $region17: #{afs_forward.1} parent=11 // pred_check
        %p165 = pneg %p79
      $region18: #{afs_forward.1} parent=11 // pred_check_branch
        %167 = sbr.rel (%p165) target = $region20
      $region19: #{afs_forward.1} parent=11 // pred_region
        _
      $region20: #{afs_forward.1} parent=11 // pred_fallthru
        _
      // Predicated region
      $region21: #{afs_forward.1} parent=11 // pred_check
        %p168 = pneg %p100
      $region22: #{afs_forward.1} parent=11 // pred_check_branch
        %170 = sbr.rel (%p168) target = $region24
      $region23: #{afs_forward.1} parent=11 // pred_region
        _
      $region24: #{afs_forward.1} parent=11 // pred_fallthru
        _
      // Predicated region
      $region25: #{afs_forward.1} parent=11 // pred_check
        %p171 = pneg %p121
      $region26: #{afs_forward.1} parent=11 // pred_check_branch
        %173 = sbr.rel (%p171) target = $region28
      $region27: #{afs_forward.1} parent=11 // pred_region
        _
      $region28: #{afs_forward.1} parent=11 // pred_fallthru
        _
    $region12: #{afs_forward.1} parent=5 // pred_fallthru
      _
    %p174 = scmp.lt.s32.totalorder %s11, 2
    // Predicated region
    $region29: #{afs_forward.1} parent=5 // pred_check
      %p175 = pneg %p174
    $region30: #{afs_forward.1} parent=5 // pred_check_branch
      %177 = sbr.rel (%p175) target = $region32
    $region31: #{afs_forward.1} parent=5 // pred_region
      // Predicated region
      $region33: #{afs_forward.1} parent=31 // pred_check
        %p178 = pneg %p31
      $region34: #{afs_forward.1} parent=31 // pred_check_branch
        %180 = sbr.rel (%p178) target = $region36
      $region35: #{afs_forward.1} parent=31 // pred_region
        %p181 = scmp.lt.s32.totalorder %s11, 1
        %s182 = scalar_select %p181, %s11, 1
        %s183 = smul.addr %s182, 32
        %s184 = smul.addr %s183, 8
        %s185 = scalar_lea.vmem %s0, %s184
      $region36: #{afs_forward.1} parent=31 // pred_fallthru
        _
    $region32: #{afs_forward.1} parent=5 // pred_fallthru
      _
    %p186 = scmp.le.s32.totalorder 1, %s11
    %p187 = scmp.lt.s32.totalorder %s11, 3
    %p188 = pnand %p186, %p187
    %p189 = pneg %p188
    // Predicated region
    $region37: #{afs_forward.1} parent=5 // pred_check
      _
    $region38: #{afs_forward.1} parent=5 // pred_check_branch
      %191 = sbr.rel (%p188) target = $region40
    $region39: #{afs_forward.1} parent=5 // pred_region
      %s192 = ssub.s32 %s11, 1
      %p193 = scmp.lt.s32.totalorder %s16, 1
      %s194 = scalar_select %p193, %s16, 1
      %s195 = smul.addr %s194, 32
      %s196 = smul.addr %s195, 8
      %s197 = scalar_lea.vmem %s0, %s196
      %p198 = pneg %p37
      %p199 = pneg %p34
      %p200 = pneg %p58
      %p201 = pneg %p55
      %p202 = pneg %p79
      %p203 = pneg %p76
      %p204 = pneg %p100
      %p205 = pneg %p97
      %p206 = pneg %p121
      %p207 = pneg %p118
      %p208 = pneg %p147
      %p209 = pneg %p144
      %p210 = scmp.lt.s32.totalorder %s16, 1
      %s211 = scalar_select %p210, %s16, 1
      %s212 = smul.addr %s211, 32
      %s213 = smul.addr %s212, 8
      %s214 = scalar_lea.vmem %s5, %s213
      %p215 = scmp.lt.s32.totalorder %s16, 1
      %s216 = scalar_select %p215, %s16, 1
      %s217 = smul.addr %s216, 32
      %s218 = smul.addr %s217, 8
      %s219 = scalar_lea.vmem %s0, %s218
      %p220 = scmp.lt.s32.totalorder %s16, 1
      %s221 = scalar_select %p220, %s16, 1
      %s222 = smul.addr %s221, 32
      %s223 = smul.addr %s222, 8
      %s224 = scalar_lea.vmem %s5, %s223
      %v225 = vld [vmem:[%s219] sm:$0xff]
      %v226 = vld [vmem:[%s219 + $0x8] sm:$0xff]
      %v227 = vld [vmem:[%s219 + $0x10] sm:$0xff]
      %v228 = vld [vmem:[%s219 + $0x18] sm:$0xff]
      %v229 = vld [vmem:[%s219 + $0x20] sm:$0xff]
      %v230 = vld [vmem:[%s219 + $0x28] sm:$0xff]
      %v231 = vld [vmem:[%s219 + $0x30] sm:$0xff]
      %v232 = vld [vmem:[%s219 + $0x38] sm:$0xff]
      %v233 = vld [vmem:[%s219 + $0x40] sm:$0xff]
      %v234 = vld [vmem:[%s219 + $0x48] sm:$0xff]
      %v235 = vld [vmem:[%s219 + $0x50] sm:$0xff]
      %v236 = vld [vmem:[%s219 + $0x58] sm:$0xff]
      %v237 = vld [vmem:[%s219 + $0x60] sm:$0xff]
      %v238 = vld [vmem:[%s219 + $0x68] sm:$0xff]
      %v239 = vld [vmem:[%s219 + $0x70] sm:$0xff]
      %v240 = vld [vmem:[%s219 + $0x78] sm:$0xff]
      %v241 = vld [vmem:[%s219 + $0x80] sm:$0xff]
      %v242 = vld [vmem:[%s219 + $0x88] sm:$0xff]
      %v243 = vld [vmem:[%s219 + $0x90] sm:$0xff]
      %v244 = vld [vmem:[%s219 + $0x98] sm:$0xff]
      %v245 = vld [vmem:[%s219 + $0xa0] sm:$0xff]
      %v246 = vld [vmem:[%s219 + $0xa8] sm:$0xff]
      %v247 = vld [vmem:[%s219 + $0xb0] sm:$0xff]
      %v248 = vld [vmem:[%s219 + $0xb8] sm:$0xff]
      %v249 = vld [vmem:[%s219 + $0xc0] sm:$0xff]
      %v250 = vld [vmem:[%s219 + $0xc8] sm:$0xff]
      %v251 = vld [vmem:[%s219 + $0xd0] sm:$0xff]
      %v252 = vld [vmem:[%s219 + $0xd8] sm:$0xff]
      %v253 = vld [vmem:[%s219 + $0xe0] sm:$0xff]
      %v254 = vld [vmem:[%s219 + $0xe8] sm:$0xff]
      %v255 = vld [vmem:[%s219 + $0xf0] sm:$0xff]
      %v256 = vld [vmem:[%s219 + $0xf8] sm:$0xff]
      %v257 = vadd.f32 %v225, %v226
      %258 = vadd.xlane.f32.xlu0 %v257
      %v259 = vpop.xlane.xlu0 %258
      %v260 = vadd.f32 %v227, %v228
      %261 = vadd.xlane.f32.xlu0 %v260
      %v262 = vpop.xlane.xlu0 %261
      %v263 = vadd.f32 %v229, %v230
      %264 = vadd.xlane.f32.xlu0 %v263
      %v265 = vpop.xlane.xlu0 %264
      %v266 = vadd.f32 %v231, %v232
      %267 = vadd.xlane.f32.xlu0 %v266
      %v268 = vpop.xlane.xlu0 %267
      %v269 = vadd.f32 %v233, %v234
      %270 = vadd.xlane.f32.xlu0 %v269
      %v271 = vpop.xlane.xlu0 %270
      %v272 = vadd.f32 %v235, %v236
      %273 = vadd.xlane.f32.xlu0 %v272
      %v274 = vpop.xlane.xlu0 %273
      %v275 = vadd.f32 %v237, %v238
      %276 = vadd.xlane.f32.xlu0 %v275
      %v277 = vpop.xlane.xlu0 %276
      %v278 = vadd.f32 %v239, %v240
      %279 = vadd.xlane.f32.xlu0 %v278
      %v280 = vpop.xlane.xlu0 %279
      %v281 = vadd.f32 %v241, %v242
      %282 = vadd.xlane.f32.xlu0 %v281
      %v283 = vpop.xlane.xlu0 %282
      %v284 = vadd.f32 %v243, %v244
      %285 = vadd.xlane.f32.xlu0 %v284
      %v286 = vpop.xlane.xlu0 %285
      %v287 = vadd.f32 %v245, %v246
      %288 = vadd.xlane.f32.xlu0 %v287
      %v289 = vpop.xlane.xlu0 %288
      %v290 = vadd.f32 %v247, %v248
      %291 = vadd.xlane.f32.xlu0 %v290
      %v292 = vpop.xlane.xlu0 %291
      %v293 = vadd.f32 %v249, %v250
      %294 = vadd.xlane.f32.xlu0 %v293
      %v295 = vpop.xlane.xlu0 %294
      %v296 = vadd.f32 %v251, %v252
      %297 = vadd.xlane.f32.xlu0 %v296
      %v298 = vpop.xlane.xlu0 %297
      %v299 = vadd.f32 %v253, %v254
      %300 = vadd.xlane.f32.xlu0 %v299
      %v301 = vpop.xlane.xlu0 %300
      %v302 = vadd.f32 %v255, %v256
      %303 = vadd.xlane.f32.xlu0 %v302
      %v304 = vpop.xlane.xlu0 %303
      %v305 = vrcp.pop 256.0
      %v306 = vmul.f32 %v259, %v305
      %v307 = vmul.f32 %v262, %v305
      %v308 = vmul.f32 %v265, %v305
      %v309 = vmul.f32 %v268, %v305
      %v310 = vmul.f32 %v271, %v305
      %v311 = vmul.f32 %v274, %v305
      %v312 = vmul.f32 %v277, %v305
      %v313 = vmul.f32 %v280, %v305
      %v314 = vmul.f32 %v283, %v305
      %v315 = vmul.f32 %v286, %v305
      %v316 = vmul.f32 %v289, %v305
      %v317 = vmul.f32 %v292, %v305
      %v318 = vmul.f32 %v295, %v305
      %v319 = vmul.f32 %v298, %v305
      %v320 = vmul.f32 %v301, %v305
      %v321 = vmul.f32 %v304, %v305
      %v322 = vld [vmem:[%s1] sm:$0xff]
      %v323 = vld [vmem:[%s1 + $0x8] sm:$0xff]
      %v324 = vld [vmem:[%s1 + $0x10] sm:$0xff]
      %v325 = vld [vmem:[%s1 + $0x18] sm:$0xff]
      %v326 = vld [vmem:[%s1 + $0x20] sm:$0xff]
      %v327 = vld [vmem:[%s1 + $0x28] sm:$0xff]
      %v328 = vld [vmem:[%s1 + $0x30] sm:$0xff]
      %v329 = vld [vmem:[%s1 + $0x38] sm:$0xff]
      %v330 = vld [vmem:[%s1 + $0x40] sm:$0xff]
      %v331 = vld [vmem:[%s1 + $0x48] sm:$0xff]
      %v332 = vld [vmem:[%s1 + $0x50] sm:$0xff]
      %v333 = vld [vmem:[%s1 + $0x58] sm:$0xff]
      %v334 = vld [vmem:[%s1 + $0x60] sm:$0xff]
      %v335 = vld [vmem:[%s1 + $0x68] sm:$0xff]
      %v336 = vld [vmem:[%s1 + $0x70] sm:$0xff]
      %v337 = vld [vmem:[%s1 + $0x78] sm:$0xff]
      %v338 = vld [vmem:[%s2] sm:$0x1]
      %v355 = vlaneseq
      %v356 = vand.u32 %v355, 127
      %v357 = vlaneseq
      %v358 = vshrl.u32 %v357, 7
      %v359 = vsub.s32 %v356, %v358
      %v360 = vrot.slane %v306, %v359
      %v361 = vadd.s32 %v356, 4294967288
      %v362 = vlaneseq
      %v363 = vshrl.u32 %v362, 7
      %v364 = vsub.s32 %v361, %v363
      %v365 = vrot.slane %v307, %v364
      %vm366 = vcmask 130112
      %v367 = vsel %vm366, %v365, %v360
      %v368 = vadd.s32 %v356, 4294967280
      %v369 = vlaneseq
      %v370 = vshrl.u32 %v369, 7
      %v371 = vsub.s32 %v368, %v370
      %v372 = vrot.slane %v308, %v371
      %vm373 = vcmask 195712
      %v374 = vsel %vm373, %v372, %v367
      %v375 = vadd.s32 %v356, 4294967272
      %v376 = vlaneseq
      %v377 = vshrl.u32 %v376, 7
      %v378 = vsub.s32 %v375, %v377
      %v379 = vrot.slane %v309, %v378
      %vm380 = vcmask 261312
      %v381 = vsel %vm380, %v379, %v374
      %v382 = vadd.s32 %v356, 4294967264
      %v383 = vlaneseq
      %v384 = vshrl.u32 %v383, 7
      %v385 = vsub.s32 %v382, %v384
      %v386 = vrot.slane %v310, %v385
      %vm387 = vcmask 326912
      %v388 = vsel %vm387, %v386, %v381
      %v389 = vadd.s32 %v356, 4294967256
      %v390 = vlaneseq
      %v391 = vshrl.u32 %v390, 7
      %v392 = vsub.s32 %v389, %v391
      %v393 = vrot.slane %v311, %v392
      %vm394 = vcmask 392512
      %v395 = vsel %vm394, %v393, %v388
      %v396 = vadd.s32 %v356, 4294967248
      %v397 = vlaneseq
      %v398 = vshrl.u32 %v397, 7
      %v399 = vsub.s32 %v396, %v398
      %v400 = vrot.slane %v312, %v399
      %vm401 = vcmask 458112
      %v402 = vsel %vm401, %v400, %v395
      %v403 = vadd.s32 %v356, 4294967240
      %v404 = vlaneseq
      %v405 = vshrl.u32 %v404, 7
      %v406 = vsub.s32 %v403, %v405
      %v407 = vrot.slane %v313, %v406
      %vm408 = vcmask 523712
      %v409 = vsel %vm408, %v407, %v402
      %v410 = vadd.s32 %v356, 4294967232
      %v411 = vlaneseq
      %v412 = vshrl.u32 %v411, 7
      %v413 = vsub.s32 %v410, %v412
      %v414 = vrot.slane %v314, %v413
      %vm415 = vcmask 589312
      %v416 = vsel %vm415, %v414, %v409
      %v417 = vadd.s32 %v356, 4294967224
      %v418 = vlaneseq
      %v419 = vshrl.u32 %v418, 7
      %v420 = vsub.s32 %v417, %v419
      %v421 = vrot.slane %v315, %v420
      %vm422 = vcmask 654912
      %v423 = vsel %vm422, %v421, %v416
      %v424 = vadd.s32 %v356, 4294967216
      %v425 = vlaneseq
      %v426 = vshrl.u32 %v425, 7
      %v427 = vsub.s32 %v424, %v426
      %v428 = vrot.slane %v316, %v427
      %vm429 = vcmask 720512
      %v430 = vsel %vm429, %v428, %v423
      %v431 = vadd.s32 %v356, 4294967208
      %v432 = vlaneseq
      %v433 = vshrl.u32 %v432, 7
      %v434 = vsub.s32 %v431, %v433
      %v435 = vrot.slane %v317, %v434
      %vm436 = vcmask 786112
      %v437 = vsel %vm436, %v435, %v430
      %v438 = vadd.s32 %v356, 4294967200
      %v439 = vlaneseq
      %v440 = vshrl.u32 %v439, 7
      %v441 = vsub.s32 %v438, %v440
      %v442 = vrot.slane %v318, %v441
      %vm443 = vcmask 851712
      %v444 = vsel %vm443, %v442, %v437
      %v445 = vadd.s32 %v356, 4294967192
      %v446 = vlaneseq
      %v447 = vshrl.u32 %v446, 7
      %v448 = vsub.s32 %v445, %v447
      %v449 = vrot.slane %v319, %v448
      %vm450 = vcmask 917312
      %v451 = vsel %vm450, %v449, %v444
      %v452 = vadd.s32 %v356, 4294967184
      %v453 = vlaneseq
      %v454 = vshrl.u32 %v453, 7
      %v455 = vsub.s32 %v452, %v454
      %v456 = vrot.slane %v320, %v455
      %vm457 = vcmask 982912
      %v458 = vsel %vm457, %v456, %v451
      %v459 = vadd.s32 %v356, 4294967176
      %v460 = vlaneseq
      %v461 = vshrl.u32 %v460, 7
      %v462 = vsub.s32 %v459, %v461
      %v463 = vrot.slane %v321, %v462
      %vm464 = vcmask 1048512
      %v465 = vsel %vm464, %v463, %v458
      %467 = vmatprep.subr.mxu0 0.0
      %468 = vmatpush1.msra.mxu0 %v322
      %469 = vmatprep.subr.mxu0 0.0
      %470 = vmatpush1.msra.mxu0 %v323
      %471 = vmatprep.subr.mxu0 0.0
      %472 = vmatpush1.msra.mxu0 %v324
      %473 = vmatprep.subr.mxu0 0.0
      %474 = vmatpush1.msra.mxu0 %v325
      %475 = vmatprep.subr.mxu0 0.0
      %476 = vmatpush1.msra.mxu0 %v326
      %477 = vmatprep.subr.mxu0 0.0
      %478 = vmatpush1.msra.mxu0 %v327
      %479 = vmatprep.subr.mxu0 0.0
      %480 = vmatpush1.msra.mxu0 %v328
      %481 = vmatprep.subr.mxu0 0.0
      %482 = vmatpush1.msra.mxu0 %v329
      %483 = vmatprep.subr.mxu0 0.0
      %484 = vmatpush1.msra.mxu0 %v330
      %485 = vmatprep.subr.mxu0 0.0
      %486 = vmatpush1.msra.mxu0 %v331
      %487 = vmatprep.subr.mxu0 0.0
      %488 = vmatpush1.msra.mxu0 %v332
      %489 = vmatprep.subr.mxu0 0.0
      %490 = vmatpush1.msra.mxu0 %v333
      %491 = vmatprep.subr.mxu0 0.0
      %492 = vmatpush1.msra.mxu0 %v334
      %493 = vmatprep.subr.mxu0 0.0
      %494 = vmatpush1.msra.mxu0 %v335
      %495 = vmatprep.subr.mxu0 0.0
      %496 = vmatpush1.msra.mxu0 %v336
      %497 = vmatprep.subr.mxu0 0.0
      %498 = vmatpush1.msra.mxu0 %v337
      %499 = vmatprep.subr.mxu0 0.0
      %500 = vmatpush1.msra.mxu0 0.0
      %501 = vmatprep.subr.mxu0 0.0
      %502 = vmatpush1.msra.mxu0 0.0
      %503 = vmatprep.subr.mxu0 0.0
      %504 = vmatpush1.msra.mxu0 0.0
      %505 = vmatprep.subr.mxu0 0.0
      %506 = vmatpush1.msra.mxu0 0.0
      %507 = vmatprep.subr.mxu0 0.0
      %508 = vmatpush1.msra.mxu0 0.0
      %509 = vmatprep.subr.mxu0 0.0
      %510 = vmatpush1.msra.mxu0 0.0
      %511 = vmatprep.subr.mxu0 0.0
      %512 = vmatpush1.msra.mxu0 0.0
      %513 = vmatprep.subr.mxu0 0.0
      %514 = vmatpush1.msra.mxu0 0.0
      %515 = vmatprep.subr.mxu0 0.0
      %516 = vmatpush1.msra.mxu0 0.0
      %517 = vmatprep.subr.mxu0 0.0
      %518 = vmatpush1.msra.mxu0 0.0
      %519 = vmatprep.subr.mxu0 0.0
      %520 = vmatpush1.msra.mxu0 0.0
      %521 = vmatprep.subr.mxu0 0.0
      %522 = vmatpush1.msra.mxu0 0.0
      %523 = vmatprep.subr.mxu0 0.0
      %524 = vmatpush1.msra.mxu0 0.0
      %525 = vmatprep.subr.mxu0 0.0
      %526 = vmatpush1.msra.mxu0 0.0
      %527 = vmatprep.subr.mxu0 0.0
      %528 = vmatpush1.msra.mxu0 0.0
      %529 = vmatprep.subr.mxu0 0.0
      %530 = vmatpush1.msra.mxu0 0.0
      %531 = vmatprep.mubr.f32.mxu0 0.0
      %532 = vmatmul.mubr.f32.gmra.mrb[0].mxu0 %v465
      %v533 = vpop.f32.mrb[0].mxu0
      %v534 = vadd.f32 %v338, %v533
      %v535 = vpop.f32.mrb[0].mxu0
      %536 = vdwg.mxu0
      %v537 = vld [vmem:[%s3] sm:$0xff]
      %v538 = vld [vmem:[%s3 + $0x8] sm:$0xff]
      %v539 = vld [vmem:[%s3 + $0x10] sm:$0xff]
      %v540 = vld [vmem:[%s3 + $0x18] sm:$0xff]
      %v541 = vld [vmem:[%s3 + $0x20] sm:$0xff]
      %v542 = vld [vmem:[%s3 + $0x28] sm:$0xff]
      %v543 = vld [vmem:[%s3 + $0x30] sm:$0xff]
      %v544 = vld [vmem:[%s3 + $0x38] sm:$0xff]
      %v545 = vld [vmem:[%s3 + $0x40] sm:$0xff]
      %v546 = vld [vmem:[%s3 + $0x48] sm:$0xff]
      %v547 = vld [vmem:[%s3 + $0x50] sm:$0xff]
      %v548 = vld [vmem:[%s3 + $0x58] sm:$0xff]
      %v549 = vld [vmem:[%s3 + $0x60] sm:$0xff]
      %v550 = vld [vmem:[%s3 + $0x68] sm:$0xff]
      %v551 = vld [vmem:[%s3 + $0x70] sm:$0xff]
      %v552 = vld [vmem:[%s3 + $0x78] sm:$0xff]
      %v553 = vld [vmem:[%s4] sm:$0x1]
      %554 = vmatprep.subr.mxu0 0.0
      %555 = vmatpush1.msra.mxu0 %v537
      %556 = vmatprep.subr.mxu0 0.0
      %557 = vmatpush1.msra.mxu0 %v538
      %558 = vmatprep.subr.mxu0 0.0
      %559 = vmatpush1.msra.mxu0 %v539
      %560 = vmatprep.subr.mxu0 0.0
      %561 = vmatpush1.msra.mxu0 %v540
      %562 = vmatprep.subr.mxu0 0.0
      %563 = vmatpush1.msra.mxu0 %v541
      %564 = vmatprep.subr.mxu0 0.0
      %565 = vmatpush1.msra.mxu0 %v542
      %566 = vmatprep.subr.mxu0 0.0
      %567 = vmatpush1.msra.mxu0 %v543
      %568 = vmatprep.subr.mxu0 0.0
      %569 = vmatpush1.msra.mxu0 %v544
      %570 = vmatprep.subr.mxu0 0.0
      %571 = vmatpush1.msra.mxu0 %v545
      %572 = vmatprep.subr.mxu0 0.0
      %573 = vmatpush1.msra.mxu0 %v546
      %574 = vmatprep.subr.mxu0 0.0
      %575 = vmatpush1.msra.mxu0 %v547
      %576 = vmatprep.subr.mxu0 0.0
      %577 = vmatpush1.msra.mxu0 %v548
      %578 = vmatprep.subr.mxu0 0.0
      %579 = vmatpush1.msra.mxu0 %v549
      %580 = vmatprep.subr.mxu0 0.0
      %581 = vmatpush1.msra.mxu0 %v550
      %582 = vmatprep.subr.mxu0 0.0
      %583 = vmatpush1.msra.mxu0 %v551
      %584 = vmatprep.subr.mxu0 0.0
      %585 = vmatpush1.msra.mxu0 %v552
      %586 = vmatprep.subr.mxu0 0.0
      %587 = vmatpush1.msra.mxu0 0.0
      %588 = vmatprep.subr.mxu0 0.0
      %589 = vmatpush1.msra.mxu0 0.0
      %590 = vmatprep.subr.mxu0 0.0
      %591 = vmatpush1.msra.mxu0 0.0
      %592 = vmatprep.subr.mxu0 0.0
      %593 = vmatpush1.msra.mxu0 0.0
      %594 = vmatprep.subr.mxu0 0.0
      %595 = vmatpush1.msra.mxu0 0.0
      %596 = vmatprep.subr.mxu0 0.0
      %597 = vmatpush1.msra.mxu0 0.0
      %598 = vmatprep.subr.mxu0 0.0
      %599 = vmatpush1.msra.mxu0 0.0
      %600 = vmatprep.subr.mxu0 0.0
      %601 = vmatpush1.msra.mxu0 0.0
      %602 = vmatprep.subr.mxu0 0.0
      %603 = vmatpush1.msra.mxu0 0.0
      %604 = vmatprep.subr.mxu0 0.0
      %605 = vmatpush1.msra.mxu0 0.0
      %606 = vmatprep.subr.mxu0 0.0
      %607 = vmatpush1.msra.mxu0 0.0
      %608 = vmatprep.subr.mxu0 0.0
      %609 = vmatpush1.msra.mxu0 0.0
      %610 = vmatprep.subr.mxu0 0.0
      %611 = vmatpush1.msra.mxu0 0.0
      %612 = vmatprep.subr.mxu0 0.0
      %613 = vmatpush1.msra.mxu0 0.0
      %614 = vmatprep.subr.mxu0 0.0
      %615 = vmatpush1.msra.mxu0 0.0
      %616 = vmatprep.subr.mxu0 0.0
      %617 = vmatpush1.msra.mxu0 0.0
      %618 = vmatprep.mubr.f32.mxu0 0.0
      %619 = vmatmul.mubr.f32.gmra.mrb[0].mxu0 %v534
      %v620 = vpop.f32.mrb[0].mxu0
      %v621 = vadd.f32 %v553, %v620
      %v622 = vpop.f32.mrb[0].mxu0
      %623 = vdwg.mxu0
      %v624 = vxor.u32 %v621, 2147483648
      %v625 = vmul.f32 %v624, 1.442695
      %v626 = vpow.pop %v625
      %v627 = vadd.f32 %v626, 1.0
      %v628 = vrcp.pop %v627
      %v629 = vmul.f32 1.0, %v628
      %v630 = vlaneseq
      %v631 = vshrl.u32 %v630, 7
      %v632 = vsub.s32 0, %v631
      %v633 = vrot.slane %v629, %v632
      %635 = vbcast.lane.b32.xlu0 %v633, 256
      %v636 = vpop.permute.xlu0 %635
      %s638 = sor.u32 256, 8
      %639 = vbcast.lane.b32.xlu0 %v633, %s638
      %v640 = vpop.permute.xlu0 %639
      %s642 = sor.u32 256, 16
      %643 = vbcast.lane.b32.xlu0 %v633, %s642
      %v644 = vpop.permute.xlu0 %643
      %s646 = sor.u32 256, 24
      %647 = vbcast.lane.b32.xlu0 %v633, %s646
      %v648 = vpop.permute.xlu0 %647
      %s650 = sor.u32 256, 32
      %651 = vbcast.lane.b32.xlu0 %v633, %s650
      %v652 = vpop.permute.xlu0 %651
      %s654 = sor.u32 256, 40
      %655 = vbcast.lane.b32.xlu0 %v633, %s654
      %v656 = vpop.permute.xlu0 %655
      %s658 = sor.u32 256, 48
      %659 = vbcast.lane.b32.xlu0 %v633, %s658
      %v660 = vpop.permute.xlu0 %659
      %s662 = sor.u32 256, 56
      %663 = vbcast.lane.b32.xlu0 %v633, %s662
      %v664 = vpop.permute.xlu0 %663
      %s666 = sor.u32 256, 64
      %667 = vbcast.lane.b32.xlu0 %v633, %s666
      %v668 = vpop.permute.xlu0 %667
      %s670 = sor.u32 256, 72
      %671 = vbcast.lane.b32.xlu0 %v633, %s670
      %v672 = vpop.permute.xlu0 %671
      %s674 = sor.u32 256, 80
      %675 = vbcast.lane.b32.xlu0 %v633, %s674
      %v676 = vpop.permute.xlu0 %675
      %s678 = sor.u32 256, 88
      %679 = vbcast.lane.b32.xlu0 %v633, %s678
      %v680 = vpop.permute.xlu0 %679
      %s682 = sor.u32 256, 96
      %683 = vbcast.lane.b32.xlu0 %v633, %s682
      %v684 = vpop.permute.xlu0 %683
      %s686 = sor.u32 256, 104
      %687 = vbcast.lane.b32.xlu0 %v633, %s686
      %v688 = vpop.permute.xlu0 %687
      %s690 = sor.u32 256, 112
      %691 = vbcast.lane.b32.xlu0 %v633, %s690
      %v692 = vpop.permute.xlu0 %691
      %s694 = sor.u32 256, 120
      %695 = vbcast.lane.b32.xlu0 %v633, %s694
      %v696 = vpop.permute.xlu0 %695
      %v697 = vmul.f32 %v636, %v225
      %v698 = vmul.f32 %v636, %v226
      %v699 = vmul.f32 %v640, %v227
      %v700 = vmul.f32 %v640, %v228
      %v701 = vmul.f32 %v644, %v229
      %v702 = vmul.f32 %v644, %v230
      %v703 = vmul.f32 %v648, %v231
      %v704 = vmul.f32 %v648, %v232
      %v705 = vmul.f32 %v652, %v233
      %v706 = vmul.f32 %v652, %v234
      %v707 = vmul.f32 %v656, %v235
      %v708 = vmul.f32 %v656, %v236
      %v709 = vmul.f32 %v660, %v237
      %v710 = vmul.f32 %v660, %v238
      %v711 = vmul.f32 %v664, %v239
      %v712 = vmul.f32 %v664, %v240
      %v713 = vmul.f32 %v668, %v241
      %v714 = vmul.f32 %v668, %v242
      %v715 = vmul.f32 %v672, %v243
      %v716 = vmul.f32 %v672, %v244
      %v717 = vmul.f32 %v676, %v245
      %v718 = vmul.f32 %v676, %v246
      %v719 = vmul.f32 %v680, %v247
      %v720 = vmul.f32 %v680, %v248
      %v721 = vmul.f32 %v684, %v249
      %v722 = vmul.f32 %v684, %v250
      %v723 = vmul.f32 %v688, %v251
      %v724 = vmul.f32 %v688, %v252
      %v725 = vmul.f32 %v692, %v253
      %v726 = vmul.f32 %v692, %v254
      %v727 = vmul.f32 %v696, %v255
      %v728 = vmul.f32 %v696, %v256
      %729 = vst [vmem:[%s224] sm:$0xff] %v697
      %730 = vst [vmem:[%s224 + $0x8] sm:$0xff] %v698
      %731 = vst [vmem:[%s224 + $0x10] sm:$0xff] %v699
      %732 = vst [vmem:[%s224 + $0x18] sm:$0xff] %v700
      %733 = vst [vmem:[%s224 + $0x20] sm:$0xff] %v701
      %734 = vst [vmem:[%s224 + $0x28] sm:$0xff] %v702
      %735 = vst [vmem:[%s224 + $0x30] sm:$0xff] %v703
      %736 = vst [vmem:[%s224 + $0x38] sm:$0xff] %v704
      %737 = vst [vmem:[%s224 + $0x40] sm:$0xff] %v705
      %738 = vst [vmem:[%s224 + $0x48] sm:$0xff] %v706
      %739 = vst [vmem:[%s224 + $0x50] sm:$0xff] %v707
      %740 = vst [vmem:[%s224 + $0x58] sm:$0xff] %v708
      %741 = vst [vmem:[%s224 + $0x60] sm:$0xff] %v709
      %742 = vst [vmem:[%s224 + $0x68] sm:$0xff] %v710
      %743 = vst [vmem:[%s224 + $0x70] sm:$0xff] %v711
      %744 = vst [vmem:[%s224 + $0x78] sm:$0xff] %v712
      %745 = vst [vmem:[%s224 + $0x80] sm:$0xff] %v713
      %746 = vst [vmem:[%s224 + $0x88] sm:$0xff] %v714
      %747 = vst [vmem:[%s224 + $0x90] sm:$0xff] %v715
      %748 = vst [vmem:[%s224 + $0x98] sm:$0xff] %v716
      %749 = vst [vmem:[%s224 + $0xa0] sm:$0xff] %v717
      %750 = vst [vmem:[%s224 + $0xa8] sm:$0xff] %v718
      %751 = vst [vmem:[%s224 + $0xb0] sm:$0xff] %v719
      %752 = vst [vmem:[%s224 + $0xb8] sm:$0xff] %v720
      %753 = vst [vmem:[%s224 + $0xc0] sm:$0xff] %v721
      %754 = vst [vmem:[%s224 + $0xc8] sm:$0xff] %v722
      %755 = vst [vmem:[%s224 + $0xd0] sm:$0xff] %v723
      %756 = vst [vmem:[%s224 + $0xd8] sm:$0xff] %v724
      %757 = vst [vmem:[%s224 + $0xe0] sm:$0xff] %v725
      %758 = vst [vmem:[%s224 + $0xe8] sm:$0xff] %v726
      %759 = vst [vmem:[%s224 + $0xf0] sm:$0xff] %v727
      %760 = vst [vmem:[%s224 + $0xf8] sm:$0xff] %v728
      %p761 = scmp.lt.s32.totalorder %s16, 1
      %s762 = scalar_select %p761, %s16, 1
      %s763 = smul.addr %s762, 32
      %s764 = smul.addr %s763, 8
      %s765 = scalar_lea.vmem %s5, %s764
      // Predicated region
      $region41: #{afs_forward.1} parent=39 // pred_check
        %p766 = pneg %p144
      $region42: #{afs_forward.1} parent=39 // pred_check_branch
        %768 = sbr.rel (%p766) target = $region44
      $region43: #{afs_forward.1} parent=39 // pred_region
        _
      $region44: #{afs_forward.1} parent=39 // pred_fallthru
        _
    $region40: #{afs_forward.1} parent=5 // pred_fallthru
      _
    %p769 = scmp.le.s32.totalorder 2, %s11
    // Predicated region
    $region45: #{afs_forward.1} parent=5 // pred_check
      %p770 = pneg %p769
    $region46: #{afs_forward.1} parent=5 // pred_check_branch
      %772 = sbr.rel (%p770) target = $region48
    $region47: #{afs_forward.1} parent=5 // pred_region
      %s773 = ssub.s32 %s11, 2
      // Predicated region
      $region49: #{afs_forward.1} parent=47 // pred_check
        %p774 = pneg %p150
      $region50: #{afs_forward.1} parent=47 // pred_check_branch
        %776 = sbr.rel (%p774) target = $region52
      $region51: #{afs_forward.1} parent=47 // pred_region
        %p777 = scmp.lt.s32.totalorder %s17, 1
        %s778 = scalar_select %p777, %s17, 1
        %s779 = smul.addr %s778, 32
        %s780 = smul.addr %s779, 8
        %s781 = scalar_lea.vmem %s5, %s780
      $region52: #{afs_forward.1} parent=47 // pred_fallthru
        _
    $region48: #{afs_forward.1} parent=5 // pred_fallthru
      _
  $region6: #{afs_forward.1} parent=0 // loop_footer
    %s15 = sadd.s32 1, %s11
  $region7: #{afs_forward.1} parent=0 // loop_footer_branch
    %10 = sbr.rel target = $region3
  $region8: #{afs_forward.1} parent=0 // loop_exit
    _

</llo_original>
